<compile_context>
chip_gen: v7x
topology: tpu7x:2x2x1
jax: 0.10.0
libtpu: 0.0.40
codegen_flags: <defaults>
</compile_context>

<pallas_src>
import functools

import jax
import jax.numpy as jnp
from jax.experimental import pallas as pl
from jax.experimental.pallas import tpu as pltpu

_LANE = 128
_SUBLANE = 8
_VMEM_LIMIT = 32 * 1024 * 1024  # safe scoped-VMEM limit on v5e / v6e / v7x


# ----------------------------------------------------------------------------
# small helpers (host-side padding / tile selection)
# ----------------------------------------------------------------------------
def _round_up(x, m):
    return ((x + m - 1) // m) * m


def _pad2d(a, rows, cols):
    pr, pc = rows - a.shape[0], cols - a.shape[1]
    if pr or pc:
        a = jnp.pad(a, ((0, pr), (0, pc)))
    return a


def _pick_row_tile(n_pad, target):
    # n_pad is a multiple of 8; tile must be a multiple of 8 and divide n_pad.
    t = min(target, n_pad)
    t = max(_SUBLANE, t - t % _SUBLANE)
    while n_pad % t:
        t -= _SUBLANE
    return t


def _pick_ctr_tile(n_pad, target):
    # contraction tile is the lane dim of the A_hat block -> multiple of 128 or full.
    if n_pad <= target or n_pad % _LANE:
        return n_pad
    t = (min(target, n_pad) // _LANE) * _LANE
    while n_pad % t:
        t -= _LANE
    return t


# ----------------------------------------------------------------------------
# Encoder: one GCN hop  h <- relu(A_hat @ h @ W + b)
# Tiled: grid = (row tiles, contraction tiles); A@H partial accumulated in VMEM f32
# scratch; second (small) matmul + bias + relu done once per row tile at the last k.
# ----------------------------------------------------------------------------
def _gcn_kernel(a_ref, h_ref, w_ref, b_ref, o_ref, acc_ref):
    k = pl.program_id(1)

    @pl.when(k == 0)
    def _():
        acc_ref[...] = jnp.zeros_like(acc_ref)

    acc_ref[...] += jnp.dot(a_ref[...], h_ref[...],
                            preferred_element_type=jnp.float32)

    @pl.when(k == pl.num_programs(1) - 1)
    def _():
        z = jnp.dot(acc_ref[...].astype(w_ref.dtype), w_ref[...],
                    preferred_element_type=jnp.float32) + b_ref[...]
        o_ref[...] = jnp.maximum(z, 0.0).astype(o_ref.dtype)


def gcn_layer(a_hat, h, w, b, *, tm_target=256, tk_target=512):
    n = a_hat.shape[0]
    cin, chid = w.shape
    n_pad = _round_up(n, _SUBLANE)
    cin_p = _round_up(cin, _LANE)
    chid_p = _round_up(chid, _LANE)

    # bf16 MXU operands (f32 accumulation inside the kernel) halve the HBM stream.
    a_p = _pad2d(a_hat, n_pad, n_pad).astype(jnp.bfloat16)
    h_p = _pad2d(h, n_pad, cin_p).astype(jnp.bfloat16)
    w_p = _pad2d(w, cin_p, chid_p).astype(jnp.bfloat16)
    b_p = _pad2d(b.reshape(1, -1), 1, chid_p).astype(jnp.float32)

    tm = _pick_row_tile(n_pad, tm_target)
    tk = _pick_ctr_tile(n_pad, tk_target)
    grid = (n_pad // tm, n_pad // tk)

    flops = 2 * n_pad * n_pad * cin_p + 2 * n_pad * cin_p * chid_p
    bytes_accessed = 2 * (a_p.size + h_p.size + w_p.size + n_pad * chid_p) + 4 * chid_p

    out = pl.pallas_call(
        _gcn_kernel,
        out_shape=jax.ShapeDtypeStruct((n_pad, chid_p), jnp.bfloat16),
        grid=grid,
        in_specs=[
            pl.BlockSpec((tm, tk), lambda i, k: (i, k)),       # A_hat tile
            pl.BlockSpec((tk, cin_p), lambda i, k: (k, 0)),    # H tile
            pl.BlockSpec((cin_p, chid_p), lambda i, k: (0, 0)),  # W resident
            pl.BlockSpec((1, chid_p), lambda i, k: (0, 0)),      # bias resident
        ],
        out_specs=pl.BlockSpec((tm, chid_p), lambda i, k: (i, 0)),
        scratch_shapes=[pltpu.VMEM((tm, cin_p), jnp.float32)],
        compiler_params=pltpu.CompilerParams(
            dimension_semantics=("parallel", "arbitrary"),
            vmem_limit_bytes=_VMEM_LIMIT),
        cost_estimate=pl.CostEstimate(flops=int(flops), transcendentals=0,
                                      bytes_accessed=int(bytes_accessed)),
    )(a_p, h_p, w_p, b_p)
    return out[:n, :chid]


# ----------------------------------------------------------------------------
# Classifier: BatchNorm1d (training batch stats, eps=1e-5) -> Dropout(0.5) -> Linear
# ----------------------------------------------------------------------------
def _bn_stats_kernel(x_ref, mean_ref, istd_ref, s_ref, ss_ref, *, inv_n, eps):
    i = pl.program_id(0)

    @pl.when(i == 0)
    def _():
        s_ref[...] = jnp.zeros_like(s_ref)
        ss_ref[...] = jnp.zeros_like(ss_ref)

    x = x_ref[...].astype(jnp.float32)
    s_ref[...] += jnp.sum(x, axis=0, keepdims=True)
    ss_ref[...] += jnp.sum(x * x, axis=0, keepdims=True)

    @pl.when(i == pl.num_programs(0) - 1)
    def _():
        mean = s_ref[...] * inv_n
        var = ss_ref[...] * inv_n - mean * mean     # biased variance (matches training BN)
        mean_ref[...] = mean
        istd_ref[...] = jax.lax.rsqrt(var + eps)


def _mix32(x):
    # murmur3-fmix32 style integer mixer on wrapping int32 lanes.
    x = x ^ jax.lax.shift_right_logical(x, 16)
    x = x * jnp.int32(-2048144789)      # 0x85EBCA6B
    x = x ^ jax.lax.shift_right_logical(x, 13)
    x = x * jnp.int32(-1028477387)      # 0xC2B2AE35
    x = x ^ jax.lax.shift_right_logical(x, 16)
    return x


def _bn_dropout_linear_kernel(seed_ref, x_ref, mean_ref, istd_ref, gamma_ref,
                              beta_ref, wt_ref, b_ref, o_ref):
    i = pl.program_id(0)
    x = x_ref[...].astype(jnp.float32)
    xn = (x - mean_ref[...]) * istd_ref[...] * gamma_ref[...] + beta_ref[...]

    # Dropout(p=0.5): hash (seed, global element index); keep iff the hash top bit is 0,
    # scale-by-1/(1-p)=2 fused into a single select (no int mask tensor materialized).
    tm, hp = xn.shape
    rows = jax.lax.broadcasted_iota(jnp.int32, (tm, hp), 0) + i * tm
    cols = jax.lax.broadcasted_iota(jnp.int32, (tm, hp), 1)
    ctr = rows * hp + cols + seed_ref[0] * jnp.int32(-1640531535)   # 0x9E3779B1
    keep = _mix32(ctr) >= 0
    xd = jnp.where(keep, xn * 2.0, 0.0)

    y = jnp.dot(xd.astype(wt_ref.dtype), wt_ref[...],
                preferred_element_type=jnp.float32) + b_ref[...]
    o_ref[...] = y.astype(o_ref.dtype)


def classifier_forward(x, gamma, beta, w, b, seed, *, tm_target=512):
    n, hid = x.shape
    out_dim = w.shape[0]
    n_pad = _round_up(n, _SUBLANE)
    h_pad = _round_up(hid, _LANE)
    o_pad = _round_up(out_dim, _LANE)

    x_p = _pad2d(x, n_pad, h_pad).astype(jnp.bfloat16)
    gamma_p = _pad2d(gamma.reshape(1, -1), 1, h_pad).astype(jnp.float32)
    beta_p = _pad2d(beta.reshape(1, -1), 1, h_pad).astype(jnp.float32)
    wt_p = _pad2d(w.T, h_pad, o_pad).astype(jnp.bfloat16)     # lane-dense RHS
    b_p = _pad2d(b.reshape(1, -1), 1, o_pad).astype(jnp.float32)
    seed_arr = jnp.asarray([seed], dtype=jnp.int32)

    tm = _pick_row_tile(n_pad, tm_target)
    grid = (n_pad // tm,)

    # pass 1: per-channel batch statistics (sum / sum-of-squares accumulated in VMEM).
    # Zero-padded rows contribute nothing; divide by the true N in the finalize step.
    mean, istd = pl.pallas_call(
        functools.partial(_bn_stats_kernel, inv_n=1.0 / float(n), eps=1e-5),
        out_shape=(jax.ShapeDtypeStruct((1, h_pad), jnp.float32),
                   jax.ShapeDtypeStruct((1, h_pad), jnp.float32)),
        grid=grid,
        in_specs=[pl.BlockSpec((tm, h_pad), lambda i: (i, 0))],
        out_specs=(pl.BlockSpec((1, h_pad), lambda i: (0, 0)),
                   pl.BlockSpec((1, h_pad), lambda i: (0, 0))),
        scratch_shapes=[pltpu.VMEM((1, h_pad), jnp.float32),
                        pltpu.VMEM((1, h_pad), jnp.float32)],
        compiler_params=pltpu.CompilerParams(
            dimension_semantics=("arbitrary",),
            vmem_limit_bytes=_VMEM_LIMIT),
    )(x_p)

    # pass 2: normalize + dropout + linear, row-tiled, lane-dense (o_pad=128k) output.
    flops = 2 * n_pad * h_pad * o_pad + 12 * n_pad * h_pad
    bytes_accessed = 2 * (x_p.size + wt_p.size) + 4 * (n_pad * o_pad + 4 * h_pad + o_pad)
    out = pl.pallas_call(
        _bn_dropout_linear_kernel,
        out_shape=jax.ShapeDtypeStruct((n_pad, o_pad), jnp.float32),
        grid=grid,
        in_specs=[
            pl.BlockSpec(memory_space=pltpu.SMEM),            # dropout seed scalar
            pl.BlockSpec((tm, h_pad), lambda i: (i, 0)),      # x tile
            pl.BlockSpec((1, h_pad), lambda i: (0, 0)),       # mean
            pl.BlockSpec((1, h_pad), lambda i: (0, 0)),       # inv std
            pl.BlockSpec((1, h_pad), lambda i: (0, 0)),       # gamma
            pl.BlockSpec((1, h_pad), lambda i: (0, 0)),       # beta
            pl.BlockSpec((h_pad, o_pad), lambda i: (0, 0)),   # W^T resident
            pl.BlockSpec((1, o_pad), lambda i: (0, 0)),       # bias
        ],
        out_specs=pl.BlockSpec((tm, o_pad), lambda i: (i, 0)),
        compiler_params=pltpu.CompilerParams(
            dimension_semantics=("parallel",),
            vmem_limit_bytes=_VMEM_LIMIT),
        cost_estimate=pl.CostEstimate(flops=int(flops), transcendentals=0,
                                      bytes_accessed=int(bytes_accessed)),
    )(seed_arr, x_p, mean, istd, gamma_p, beta_p, wt_p, b_p)
    return out[:n, :out_dim]


# ----------------------------------------------------------------------------
# Pipeline wrapper (glue in plain JAX)
# ----------------------------------------------------------------------------
def init_params(key, in_dim, hid_dim, out_dim, num_hops):
    params = {"enc": []}
    k = key
    d_in = in_dim
    for _ in range(num_hops):
        k, kw = jax.random.split(k)
        bound = 1.0 / float(d_in) ** 0.5
        w = jax.random.uniform(kw, (d_in, hid_dim), jnp.float32, -bound, bound)
        bl = jnp.zeros((hid_dim,), jnp.float32)
        params["enc"].append((w, bl))
        d_in = hid_dim
    # classifier: BatchNorm1d.reset_parameters -> gamma=1, beta=0
    params["gamma"] = jnp.ones((hid_dim,), jnp.float32)
    params["beta"] = jnp.zeros((hid_dim,), jnp.float32)
    # Linear.reset_parameters -> uniform(-1/sqrt(fan_in), 1/sqrt(fan_in))
    k, kw, kb = jax.random.split(k, 3)
    bound = 1.0 / float(hid_dim) ** 0.5
    params["w"] = jax.random.uniform(kw, (out_dim, hid_dim), jnp.float32, -bound, bound)
    params["b"] = jax.random.uniform(kb, (out_dim,), jnp.float32, -bound, bound)
    return params


def pipeline_forward(params, x, a_hat, dropout_seed=1234):
    # TODO(synk): BatchNorm running_mean/var are not tracked (training-mode forward only).
    h = x
    for (w, b) in params["enc"]:
        h = gcn_layer(a_hat, h, w, b)
    return classifier_forward(h, params["gamma"], params["beta"],
                              params["w"], params["b"], dropout_seed)


def make_norm_adjacency(n):
    # ring graph + self loops, symmetric normalization D^-1/2 (A+I) D^-1/2
    idx = jnp.arange(n)
    a = jnp.zeros((n, n), jnp.float32)
    a = a.at[idx, (idx + 1) % n].set(1.0)
    a = a.at[(idx + 1) % n, idx].set(1.0)
    a = a + jnp.eye(n, dtype=jnp.float32)
    deg = jnp.sum(a, axis=1)
    d_inv_sqrt = 1.0 / jnp.sqrt(deg)
    return a * d_inv_sqrt[:, None] * d_inv_sqrt[None, :]


if __name__ == "__main__":
    N, IN_DIM, HID_DIM, OUT_DIM, NUM_HOPS = 16, 32, 32, 8, 2

    key = jax.random.PRNGKey(0)
    kx, kp = jax.random.split(key)
    x = jax.random.normal(kx, (N, IN_DIM), jnp.float32)     # node features (N, C)
    a_hat = make_norm_adjacency(N)
    params = init_params(kp, IN_DIM, HID_DIM, OUT_DIM, NUM_HOPS)

    out = pipeline_forward(params, x, a_hat)
    out = jax.block_until_ready(out)
    assert out.shape == (N, OUT_DIM)
    assert bool(jnp.all(jnp.isfinite(out)))
    print("KERNEL_OK")
</pallas_src>

<mosaic_0001>
module attributes {stable_mosaic.version = 11 : i64} {
  func.func @_gcn_kernel(%arg0: i32, %arg1: i32, %arg2: memref<16x16xbf16, #tpu.memory_space<vmem>>, %arg3: memref<16x128xbf16, #tpu.memory_space<vmem>>, %arg4: memref<128x128xbf16, #tpu.memory_space<vmem>>, %arg5: memref<1x128xf32, #tpu.memory_space<vmem>>, %arg6: memref<16x128xbf16, #tpu.memory_space<vmem>>, %arg7: memref<16x128xf32, #tpu.memory_space<vmem>>) attributes {dimension_semantics = [#tpu.dimension_semantics<parallel>, #tpu.dimension_semantics<arbitrary>], iteration_bounds = array<i64: 1, 1>, scalar_prefetch = 0 : i64, scratch_operands = 1 : i64, tpu.core_type = #tpu.core_type<tc>, window_params = [{transform_indices = @transform_0, window_bounds = array<i64: 16, 16>}, {transform_indices = @transform_1, window_bounds = array<i64: 16, 128>}, {pipeline_mode = #tpu.pipeline_mode<synchronous>, transform_indices = @transform_2, window_bounds = array<i64: 128, 128>}, {pipeline_mode = #tpu.pipeline_mode<synchronous>, transform_indices = @transform_3, window_bounds = array<i64: 1, 128>}, {transform_indices = @transform_4, window_bounds = array<i64: 16, 128>}]} {
    %c0_i32 = arith.constant 0 : i32
    %0 = arith.cmpi eq, %arg1, %c0_i32 : i32
    %1 = arith.extui %0 : i1 to i32
    %c0_i32_0 = arith.constant 0 : i32
    %2 = arith.cmpi ne, %1, %c0_i32_0 : i32
    scf.if %2 {
      %cst_10 = arith.constant 0.000000e+00 : f32
      %12 = vector.broadcast %cst_10 : f32 to vector<16x128xf32>
      %c0_11 = arith.constant 0 : index
      %c0_12 = arith.constant 0 : index
      %13 = vector.load %arg7[%c0_11, %c0_12] : memref<16x128xf32, #tpu.memory_space<vmem>>, vector<16x128xf32>
      tpu.vector_store %arg7[%c0_11, %c0_12], %12 {strides = array<i32>} : memref<16x128xf32, #tpu.memory_space<vmem>>, vector<16x128xf32>,
    } else {
    }
    %c0 = arith.constant 0 : index
    %c0_1 = arith.constant 0 : index
    %3 = vector.load %arg7[%c0, %c0_1] : memref<16x128xf32, #tpu.memory_space<vmem>>, vector<16x128xf32>
    %c0_2 = arith.constant 0 : index
    %c0_3 = arith.constant 0 : index
    %4 = vector.load %arg2[%c0_2, %c0_3] : memref<16x16xbf16, #tpu.memory_space<vmem>>, vector<16x16xbf16>
    %c0_4 = arith.constant 0 : index
    %c0_5 = arith.constant 0 : index
    %5 = vector.load %arg3[%c0_4, %c0_5] : memref<16x128xbf16, #tpu.memory_space<vmem>>, vector<16x128xbf16>
    %cst = arith.constant dense<0.000000e+00> : vector<16x128xf32>
    %6 = tpu.matmul %4, %5, %cst {dimension_numbers = #tpu.dot_dimension_numbers<[1], [0], [0], [1], [0, 0, 1, 1], [], []>} : vector<16x16xbf16>, vector<16x128xbf16>, vector<16x128xf32> -> vector<16x128xf32>
    %7 = arith.addf %3, %6 : vector<16x128xf32>
    %c0_6 = arith.constant 0 : index
    %c0_7 = arith.constant 0 : index
    %8 = vector.load %arg7[%c0_6, %c0_7] : memref<16x128xf32, #tpu.memory_space<vmem>>, vector<16x128xf32>
    tpu.vector_store %arg7[%c0_6, %c0_7], %7 {strides = array<i32>} : memref<16x128xf32, #tpu.memory_space<vmem>>, vector<16x128xf32>,
    %c0_i32_8 = arith.constant 0 : i32
    %9 = arith.cmpi eq, %arg1, %c0_i32_8 : i32
    %10 = arith.extui %9 : i1 to i32
    %c0_i32_9 = arith.constant 0 : i32
    %11 = arith.cmpi ne, %10, %c0_i32_9 : i32
    scf.if %11 {
      %c0_10 = arith.constant 0 : index
      %c0_11 = arith.constant 0 : index
      %12 = vector.load %arg7[%c0_10, %c0_11] : memref<16x128xf32, #tpu.memory_space<vmem>>, vector<16x128xf32>
      %13 = arith.truncf %12 : vector<16x128xf32> to vector<16x128xbf16>
      %c0_12 = arith.constant 0 : index
      %c0_13 = arith.constant 0 : index
      %14 = vector.load %arg4[%c0_12, %c0_13] : memref<128x128xbf16, #tpu.memory_space<vmem>>, vector<128x128xbf16>
      %cst_14 = arith.constant dense<0.000000e+00> : vector<16x128xf32>
      %15 = tpu.matmul %13, %14, %cst_14 {dimension_numbers = #tpu.dot_dimension_numbers<[1], [0], [0], [1], [0, 0, 1, 1], [], []>} : vector<16x128xbf16>, vector<128x128xbf16>, vector<16x128xf32> -> vector<16x128xf32>
      %c0_15 = arith.constant 0 : index
      %c0_16 = arith.constant 0 : index
      %16 = vector.load %arg5[%c0_15, %c0_16] : memref<1x128xf32, #tpu.memory_space<vmem>>, vector<1x128xf32>
      %17 = vector.broadcast %16 : vector<1x128xf32> to vector<16x128xf32>
      %18 = arith.addf %15, %17 : vector<16x128xf32>
      %cst_17 = arith.constant 0.000000e+00 : f32
      %19 = vector.broadcast %cst_17 : f32 to vector<16x128xf32>
      %20 = arith.maximumf %18, %19 : vector<16x128xf32>
      %21 = arith.truncf %20 : vector<16x128xf32> to vector<16x128xbf16>
      %c0_18 = arith.constant 0 : index
      %c0_19 = arith.constant 0 : index
      %22 = vector.load %arg6[%c0_18, %c0_19] : memref<16x128xbf16, #tpu.memory_space<vmem>>, vector<16x128xbf16>
      tpu.vector_store %arg6[%c0_18, %c0_19], %21 {strides = array<i32>} : memref<16x128xbf16, #tpu.memory_space<vmem>>, vector<16x128xbf16>,
    } else {
    }
    return
  }
  func.func @transform_0(%arg0: i32, %arg1: i32) -> (i32, i32) {
    %c0_i32 = arith.constant 0 : i32
    return %arg0, %arg1 : i32, i32
  }
  func.func @transform_1(%arg0: i32, %arg1: i32) -> (i32, i32) {
    %c0_i32 = arith.constant 0 : i32
    %c0_i32_0 = arith.constant 0 : i32
    return %arg1, %c0_i32 : i32, i32
  }
  func.func @transform_2(%arg0: i32, %arg1: i32) -> (i32, i32) {
    %c0_i32 = arith.constant 0 : i32
    %c0_i32_0 = arith.constant 0 : i32
    %c0_i32_1 = arith.constant 0 : i32
    return %c0_i32, %c0_i32_0 : i32, i32
  }
  func.func @transform_3(%arg0: i32, %arg1: i32) -> (i32, i32) {
    %c0_i32 = arith.constant 0 : i32
    %c0_i32_0 = arith.constant 0 : i32
    %c0_i32_1 = arith.constant 0 : i32
    return %c0_i32, %c0_i32_0 : i32, i32
  }
  func.func @transform_4(%arg0: i32, %arg1: i32) -> (i32, i32) {
    %c0_i32 = arith.constant 0 : i32
    %c0_i32_0 = arith.constant 0 : i32
    return %arg0, %c0_i32 : i32, i32
  }
}

</mosaic_0001>

<llo_original>
// kernel: tpu_custom_call.1
$region0: #{tpu_custom_call.1}
  #allocation0 [shape = 'u32[]', space=smem, size = 0x4, offset = 0x4, fixed_abs, tag = 'smem constant byte address 0x4 - core index']
  #allocation1 [shape = 'u32[144,128]{1,0:T(1,128)}', space=vmem, size = 0x12000, scoped, tag = 'internal scratch']
  #allocation2 [shape = 'f32[16,128]{1,0:T(8,128)}', space=vmem, size = 0x2000, scoped, tag = 'scratch operand']
  %s0 = inlined_call_operand.hbm [shape: bf16[16,16], index: 0, kind: input, shape index: {}]
  %s1 = inlined_call_operand.hbm [shape: bf16[16,128], index: 1, kind: input, shape index: {}]
  %s2 = inlined_call_operand.hbm [shape: bf16[128,128], index: 2, kind: input, shape index: {}]
  %s3 = inlined_call_operand.vmem [shape: f32[1,128], index: 3, kind: input, shape index: {}]
  %s4 = inlined_call_operand.hbm [shape: bf16[16,128], index: 4, kind: output, shape index: {}]
  %s5 = sld [smem:[#allocation0]]
  $region46: #{tpu_custom_call.1} parent=0
    _
  %s7 = ssub.s32 1, %s5
  %s8 = scalar_select 0, %s7, %s5
  $region1: #{tpu_custom_call.1} parent=0
    #allocation3 [shape = 'u8[4096]{0}', space=vmem, size = 0x1000, scoped, tag = 'input window, operand 0, single buffered']
    #allocation4 [shape = 's32[1]{0}', space=sflag, size = 0x4, scoped, tag = 'scoped memory for tpu_custom_call.1']
    #allocation5 [shape = 's32[1]{0}', space=sflag, size = 0x4, scoped, tag = 'scoped memory for tpu_custom_call.1']
    #allocation6 [shape = 'u8[4096]{0}', space=vmem, size = 0x1000, scoped, tag = 'input window, operand 1, single buffered']
    #allocation7 [shape = 's32[1]{0}', space=sflag, size = 0x4, scoped, tag = 'scoped memory for tpu_custom_call.1']
    #allocation8 [shape = 'u8[32768]{0}', space=vmem, size = 0x8000, scoped, tag = 'input window, operand 2, single buffered']
    #allocation9 [shape = 'u8[4096]{0}', space=vmem, size = 0x1000, scoped, tag = 'output window, operand 0, single buffered']
    %9 = vsyncpa [#allocation4], 0
    %10 = vsyncpa [#allocation7], 0
    %11 = vsyncpa [#allocation5], 0
    // Predicated region
    $region2: #{tpu_custom_call.1} parent=1 // pred_check
      _
    $region3: #{tpu_custom_call.1} parent=1 // pred_check_branch
      %13 = sbr.rel (0) target = $region5
    $region4: #{tpu_custom_call.1} parent=1 // pred_region
      %s15 = ssub.s32 128, 128
      %16 = vsyncadd [#allocation4], %s15
      %s17 = sshll.u32 [#allocation3], 4
      %s18 = int_to_ptr.vmem [resolvable:$true] %s17
      %23 = dma.hbm_to_vmem [thread:$0]  %s0, 128, %s18, [#allocation4], 64, 64, 4
    $region5: #{tpu_custom_call.1} parent=1 // pred_fallthru
      _
    // Predicated region
    $region6: #{tpu_custom_call.1} parent=1 // pred_check
      _
    $region7: #{tpu_custom_call.1} parent=1 // pred_check_branch
      %25 = sbr.rel (0) target = $region9
    $region8: #{tpu_custom_call.1} parent=1 // pred_region
      %s27 = ssub.s32 128, 128
      %28 = vsyncadd [#allocation7], %s27
      %s29 = sshll.u32 [#allocation6], 4
      %s30 = int_to_ptr.vmem [resolvable:$true] %s29
      %35 = dma.hbm_to_vmem [thread:$0]  %s1, 128, %s30, [#allocation7], 64, 64, 4
    $region9: #{tpu_custom_call.1} parent=1 // pred_fallthru
      _
    // Predicated region
    $region10: #{tpu_custom_call.1} parent=1 // pred_check
      _
    $region11: #{tpu_custom_call.1} parent=1 // pred_check_branch
      %37 = sbr.rel (0) target = $region13
    $region12: #{tpu_custom_call.1} parent=1 // pred_region
      %s39 = ssub.s32 1024, 1024
      %40 = vsyncadd [#allocation7], %s39
      %s41 = sshll.u32 [#allocation8], 4
      %s42 = int_to_ptr.vmem [resolvable:$true] %s41
      %47 = dma.hbm_to_vmem [thread:$0]  %s2, 1024, %s42, [#allocation7], 64, 64, 4
    $region13: #{tpu_custom_call.1} parent=1 // pred_fallthru
      _
    // Predicated region
    $region14: #{tpu_custom_call.1} parent=1 // pred_check
      _
    $region15: #{tpu_custom_call.1} parent=1 // pred_check_branch
      %49 = sbr.rel (0) target = $region17
    $region16: #{tpu_custom_call.1} parent=1 // pred_region
      _
    $region17: #{tpu_custom_call.1} parent=1 // pred_fallthru
      _
    // Predicated region
    $region18: #{tpu_custom_call.1} parent=1 // pred_check
      _
    $region19: #{tpu_custom_call.1} parent=1 // pred_check_branch
      %51 = sbr.rel (0) target = $region21
    $region20: #{tpu_custom_call.1} parent=1 // pred_region
      %52 = dma.done [#allocation4], 128
    $region21: #{tpu_custom_call.1} parent=1 // pred_fallthru
      _
    // Predicated region
    $region22: #{tpu_custom_call.1} parent=1 // pred_check
      _
    $region23: #{tpu_custom_call.1} parent=1 // pred_check_branch
      %54 = sbr.rel (0) target = $region25
    $region24: #{tpu_custom_call.1} parent=1 // pred_region
      %55 = dma.done [#allocation7], 128
    $region25: #{tpu_custom_call.1} parent=1 // pred_fallthru
      _
    // Predicated region
    $region26: #{tpu_custom_call.1} parent=1 // pred_check
      _
    $region27: #{tpu_custom_call.1} parent=1 // pred_check_branch
      %57 = sbr.rel (0) target = $region29
    $region28: #{tpu_custom_call.1} parent=1 // pred_region
      %58 = dma.done [#allocation7], 1024
    $region29: #{tpu_custom_call.1} parent=1 // pred_fallthru
      _
    %p60 = scmp.eq.s32.totalorder 0, 0
    // Predicated region
    $region30: #{tpu_custom_call.1} parent=1 // pred_check
      %p61 = pneg %p60
    $region31: #{tpu_custom_call.1} parent=1 // pred_check_branch
      %63 = sbr.rel (%p61) target = $region33
    $region32: #{tpu_custom_call.1} parent=1 // pred_region
      %64 = vst [vmem:[#allocation2] sm:$0xff] 0.0
      %65 = vst [vmem:[#allocation2 + $0x8] sm:$0xff] 0.0
    $region33: #{tpu_custom_call.1} parent=1 // pred_fallthru
      _
    %v66 = vld [vmem:[#allocation2] sm:$0xff]
    %v67 = vld [vmem:[#allocation2 + $0x8] sm:$0xff]
    %v68 = vld [vmem:[#allocation3] sm:$0xf]
    %v69 = vld [vmem:[#allocation3 + $0x4] sm:$0xf]
    %v70 = vld [vmem:[#allocation6] sm:$0xf]
    %v71 = vld [vmem:[#allocation6 + $0x4] sm:$0xf]
    %v74 = vunpack.c.l.b16 %v68
    %v75 = vunpack.c.l.b16 %v69
    %v76 = vpack.c.b16 %v75, %v74
    %v79 = vunpack.c.l.b16 %v70
    %v80 = vunpack.c.l.b16 %v71
    %v81 = vpack.c.b16 %v80, %v79
    %vm83 = vcmask 130048
    %v85 = vsel %vm83, %v76, 0
    %87 = vmatprep.subr.bf16.mxu0 0
    %88 = vmatpush1.bf16.msra.mxu0 %v81
    %89 = vmatprep.subr.bf16.mxu0 0
    %90 = vmatpush1.bf16.msra.mxu0 0
    %91 = vmatprep.subr.bf16.mxu0 0
    %92 = vmatpush1.bf16.msra.mxu0 0
    %93 = vmatprep.subr.bf16.mxu0 0
    %94 = vmatpush1.bf16.msra.mxu0 0
    %95 = vmatprep.subr.bf16.mxu0 0
    %96 = vmatpush1.bf16.msra.mxu0 0
    %97 = vmatprep.subr.bf16.mxu0 0
    %98 = vmatpush1.bf16.msra.mxu0 0
    %99 = vmatprep.subr.bf16.mxu0 0
    %100 = vmatpush1.bf16.msra.mxu0 0
    %101 = vmatprep.subr.bf16.mxu0 0
    %102 = vmatpush1.bf16.msra.mxu0 0
    %103 = vmatprep.subr.bf16.mxu0 0
    %104 = vmatpush1.bf16.msra.mxu0 0
    %105 = vmatprep.subr.bf16.mxu0 0
    %106 = vmatpush1.bf16.msra.mxu0 0
    %107 = vmatprep.subr.bf16.mxu0 0
    %108 = vmatpush1.bf16.msra.mxu0 0
    %109 = vmatprep.subr.bf16.mxu0 0
    %110 = vmatpush1.bf16.msra.mxu0 0
    %111 = vmatprep.subr.bf16.mxu0 0
    %112 = vmatpush1.bf16.msra.mxu0 0
    %113 = vmatprep.subr.bf16.mxu0 0
    %114 = vmatpush1.bf16.msra.mxu0 0
    %115 = vmatprep.subr.bf16.mxu0 0
    %116 = vmatpush1.bf16.msra.mxu0 0
    %117 = vmatprep.subr.bf16.mxu0 0
    %118 = vmatpush1.bf16.msra.mxu0 0
    %119 = vmatprep.mubr.bf16.mxu0 0
    %120 = vmatmul.mubr.bf16.gmra.mrb[0].mxu0 %v85
    %v121 = vpop.f32.mrb[0].mxu0
    %v122 = vadd.f32 0.0, %v121
    %v123 = vpop.f32.mrb[0].mxu0
    %v124 = vpop.f32.mrb[0].mxu0
    %v125 = vadd.f32 0.0, %v124
    %v126 = vpop.f32.mrb[0].mxu0
    %127 = vdwg.mxu0
    %v128 = vadd.f32 %v66, %v122
    %v129 = vadd.f32 %v67, %v125
    %130 = vst [vmem:[#allocation2] sm:$0xff] %v128
    %131 = vst [vmem:[#allocation2 + $0x8] sm:$0xff] %v129
    // Predicated region
    $region34: #{tpu_custom_call.1} parent=1 // pred_check
      %p132 = pneg %p60
    $region35: #{tpu_custom_call.1} parent=1 // pred_check_branch
      %134 = sbr.rel (%p132) target = $region37
    $region36: #{tpu_custom_call.1} parent=1 // pred_region
      %v135 = vld [vmem:[#allocation2] sm:$0xff]
      %v136 = vld [vmem:[#allocation2 + $0x8] sm:$0xff]
      %v137 = vpack.c.bf16 %v136, %v135
      %v138 = vld [vmem:[#allocation8] sm:$0xf]
      %v139 = vld [vmem:[#allocation8 + $0x4] sm:$0xf]
      %v140 = vld [vmem:[#allocation8 + $0x8] sm:$0xf]
      %v141 = vld [vmem:[#allocation8 + $0xc] sm:$0xf]
      %v142 = vld [vmem:[#allocation8 + $0x10] sm:$0xf]
      %v143 = vld [vmem:[#allocation8 + $0x14] sm:$0xf]
      %v144 = vld [vmem:[#allocation8 + $0x18] sm:$0xf]
      %v145 = vld [vmem:[#allocation8 + $0x1c] sm:$0xf]
      %v146 = vld [vmem:[#allocation8 + $0x20] sm:$0xf]
      %v147 = vld [vmem:[#allocation8 + $0x24] sm:$0xf]
      %v148 = vld [vmem:[#allocation8 + $0x28] sm:$0xf]
      %v149 = vld [vmem:[#allocation8 + $0x2c] sm:$0xf]
      %v150 = vld [vmem:[#allocation8 + $0x30] sm:$0xf]
      %v151 = vld [vmem:[#allocation8 + $0x34] sm:$0xf]
      %v152 = vld [vmem:[#allocation8 + $0x38] sm:$0xf]
      %v153 = vld [vmem:[#allocation8 + $0x3c] sm:$0xf]
      %v154 = vld [vmem:[%s3] sm:$0x1]
      %v156 = vlaneseq
      %v157 = vshrl.u32 %v156, 7
      %v158 = vsub.s32 0, %v157
      %v159 = vrot.slane %v154, %v158
      %v177 = vunpack.c.l.b16 %v138
      %v178 = vunpack.c.l.b16 %v139
      %v179 = vunpack.c.l.b16 %v140
      %v180 = vunpack.c.l.b16 %v141
      %v181 = vunpack.c.l.b16 %v142
      %v182 = vunpack.c.l.b16 %v143
      %v183 = vunpack.c.l.b16 %v144
      %v184 = vunpack.c.l.b16 %v145
      %v185 = vunpack.c.l.b16 %v146
      %v186 = vunpack.c.l.b16 %v147
      %v187 = vunpack.c.l.b16 %v148
      %v188 = vunpack.c.l.b16 %v149
      %v189 = vunpack.c.l.b16 %v150
      %v190 = vunpack.c.l.b16 %v151
      %v191 = vunpack.c.l.b16 %v152
      %v192 = vunpack.c.l.b16 %v153
      %v193 = vpack.c.b16 %v178, %v177
      %v194 = vpack.c.b16 %v180, %v179
      %v195 = vpack.c.b16 %v182, %v181
      %v196 = vpack.c.b16 %v184, %v183
      %v197 = vpack.c.b16 %v186, %v185
      %v198 = vpack.c.b16 %v188, %v187
      %v199 = vpack.c.b16 %v190, %v189
      %v200 = vpack.c.b16 %v192, %v191
      %209 = vmatprep.subr.bf16.mxu0 0
      %210 = vmatpush1.bf16.msra.mxu0 %v193
      %211 = vmatprep.subr.bf16.mxu0 0
      %212 = vmatpush1.bf16.msra.mxu0 %v194
      %213 = vmatprep.subr.bf16.mxu0 0
      %214 = vmatpush1.bf16.msra.mxu0 %v195
      %215 = vmatprep.subr.bf16.mxu0 0
      %216 = vmatpush1.bf16.msra.mxu0 %v196
      %217 = vmatprep.subr.bf16.mxu0 0
      %218 = vmatpush1.bf16.msra.mxu0 %v197
      %219 = vmatprep.subr.bf16.mxu0 0
      %220 = vmatpush1.bf16.msra.mxu0 %v198
      %221 = vmatprep.subr.bf16.mxu0 0
      %222 = vmatpush1.bf16.msra.mxu0 %v199
      %223 = vmatprep.subr.bf16.mxu0 0
      %224 = vmatpush1.bf16.msra.mxu0 %v200
      %225 = vmatprep.subr.bf16.mxu0 0
      %226 = vmatpush1.bf16.msra.mxu0 0
      %227 = vmatprep.subr.bf16.mxu0 0
      %228 = vmatpush1.bf16.msra.mxu0 0
      %229 = vmatprep.subr.bf16.mxu0 0
      %230 = vmatpush1.bf16.msra.mxu0 0
      %231 = vmatprep.subr.bf16.mxu0 0
      %232 = vmatpush1.bf16.msra.mxu0 0
      %233 = vmatprep.subr.bf16.mxu0 0
      %234 = vmatpush1.bf16.msra.mxu0 0
      %235 = vmatprep.subr.bf16.mxu0 0
      %236 = vmatpush1.bf16.msra.mxu0 0
      %237 = vmatprep.subr.bf16.mxu0 0
      %238 = vmatpush1.bf16.msra.mxu0 0
      %239 = vmatprep.subr.bf16.mxu0 0
      %240 = vmatpush1.bf16.msra.mxu0 0
      %241 = vmatprep.mubr.bf16.mxu0 0
      %242 = vmatmul.mubr.bf16.gmra.mrb[0].mxu0 %v137
      %v243 = vpop.f32.mrb[0].mxu0
      %v244 = vadd.f32 %v159, %v243
      %v245 = vpop.f32.mrb[0].mxu0
      %v246 = vpop.f32.mrb[0].mxu0
      %v247 = vadd.f32 %v159, %v246
      %v248 = vpop.f32.mrb[0].mxu0
      %249 = vdwg.mxu0
      %v250 = vmax.f32 %v244, 0.0
      %v251 = vmax.f32 %v247, 0.0
      %v252 = vpack.c.bf16 %v251, %v250
      %v254 = vunpack.c.l.b16 %v252
      %v255 = vunpack.c.h.b16 %v252
      %v256 = vpack.c.b16 %v254, %v254
      %v257 = vpack.c.b16 %v255, %v255
      %260 = vst [vmem:[#allocation9] sm:$0xf] %v256
      %261 = vst [vmem:[#allocation9 + $0x4] sm:$0xf] %v257
    $region37: #{tpu_custom_call.1} parent=1 // pred_fallthru
      _
    // Predicated region
    $region38: #{tpu_custom_call.1} parent=1 // pred_check
      _
    $region39: #{tpu_custom_call.1} parent=1 // pred_check_branch
      %263 = sbr.rel (0) target = $region41
    $region40: #{tpu_custom_call.1} parent=1 // pred_region
      %s265 = ssub.s32 128, 128
      %266 = vsyncadd [#allocation5], %s265
      %s267 = sshll.u32 [#allocation9], 4
      %s268 = int_to_ptr.vmem [resolvable:$true] %s267
      %273 = dma.vmem_to_hbm [thread:$0]  %s268, 128, %s4, [#allocation5], 64, 64, 4
    $region41: #{tpu_custom_call.1} parent=1 // pred_fallthru
      _
    // Predicated region
    $region42: #{tpu_custom_call.1} parent=1 // pred_check
      _
    $region43: #{tpu_custom_call.1} parent=1 // pred_check_branch
      %275 = sbr.rel (0) target = $region45
    $region44: #{tpu_custom_call.1} parent=1 // pred_region
      %276 = dma.done [#allocation5], 128
    $region45: #{tpu_custom_call.1} parent=1 // pred_fallthru
      _
    %277 = vsyncpa [#allocation4], 1
    %278 = vsyncpa [#allocation7], 1
    %279 = vsyncpa [#allocation5], 1

</llo_original>
